<compile_context>
chip_gen: v7x
topology: tpu7x:2x2x1
jax: 0.10.0
libtpu: 0.0.40
codegen_flags: <defaults>
</compile_context>

<pallas_src>
import math
import functools

import jax
import jax.numpy as jnp
from jax import lax
from jax.experimental import pallas as pl
from jax.experimental.pallas import tpu as pltpu


def _sin_pos_emb_kernel(ids_ref, inv_freq_ref, delta_ref, out_ref, *,
                        padding_idx, left_pad):
    b_tile, s_tile = ids_ref.shape
    half_dim = inv_freq_ref.shape[-1]
    dim = out_ref.shape[-1]

    # per-(b, s) padding mask (only full-rank elementwise work besides stores)
    mask3 = (ids_ref[...] != padding_idx).astype(jnp.float32)[:, :, None]

    # ---- batch-invariant base angles: sin/cos over (s_tile, half_dim) only --
    s0 = pl.program_id(1) * s_tile
    t = lax.broadcasted_iota(jnp.int32, (s_tile, 1), 0) + (s0 + padding_idx + 1)
    ang = t.astype(jnp.float32) * inv_freq_ref[...]          # (s_tile, half_dim)
    sin_a = jnp.sin(ang).reshape(1, s_tile, half_dim)
    cos_a = jnp.cos(ang).reshape(1, s_tile, half_dim)

    if left_pad:
        # Per-row shift via angle addition:
        #   sin(a + d_b) = sin(a)cos(d_b) + cos(a)sin(d_b)
        #   cos(a + d_b) = cos(a)cos(d_b) - sin(a)sin(d_b)
        # with d_b = (nonpad_b - seq_len) * inv_freq, shape (b_tile,1,half_dim).
        d = (delta_ref[...].astype(jnp.float32)[:, :, None]
             * inv_freq_ref[...].reshape(1, 1, half_dim))
        sin_d = jnp.sin(d)
        cos_d = jnp.cos(d)
        sin_v = sin_a * cos_d + cos_a * sin_d                # (b, s, half)
        cos_v = cos_a * cos_d - sin_a * sin_d
    else:
        sin_v = sin_a                                         # broadcast below
        cos_v = cos_a

    out_ref[:, :, 0:half_dim] = (sin_v * mask3).astype(out_ref.dtype)
    out_ref[:, :, half_dim:2 * half_dim] = (cos_v * mask3).astype(out_ref.dtype)
    if dim > 2 * half_dim:
        # odd embedding_dim: trailing zero column (also zero for padding rows)
        out_ref[:, :, 2 * half_dim:] = jnp.zeros(
            (b_tile, s_tile, dim - 2 * half_dim), out_ref.dtype)


def _vmem_capacity_bytes():
    try:
        cap = int(pltpu.get_tpu_info().vmem_capacity_bytes)
        if cap >= (16 << 20):
            return cap
    except Exception:
        pass
    return 64 << 20   # conservative default (v7x per-TensorCore VMEM)


def _choose_tiles(bsz, seq_len, dim, out_itemsize, target_bytes):
    """Pick (b_tile, s_tile) obeying TPU block constraints.

    ids block is (b_tile, s_tile): b_tile must be a multiple of 8 or == bsz,
    s_tile must be a multiple of 128 or == seq_len.
    """
    row_bytes = max(1, seq_len * dim * out_itemsize)
    if row_bytes * min(bsz, 8) <= target_bytes:
        s_tile = seq_len
        b_fit = max(1, target_bytes // row_bytes)
        if b_fit >= bsz:
            b_tile = bsz
        else:
            b_tile = min(bsz, max(8, (b_fit // 8) * 8))
    else:
        b_tile = bsz if bsz <= 8 else 8
        s_budget = max(1, target_bytes // (out_itemsize * b_tile * dim))
        if s_budget >= seq_len:
            s_tile = seq_len
        else:
            s_tile = min(seq_len, max(128, (s_budget // 128) * 128))
    return b_tile, s_tile


def _ensure_two_grid_steps(bsz, seq_len, b_tile, s_tile):
    """v7x megacore: guarantee >=2 grid steps along a 'parallel' axis."""
    if pl.cdiv(bsz, b_tile) * pl.cdiv(seq_len, s_tile) >= 2:
        return b_tile, s_tile
    if seq_len >= 256:
        s_tile = max(128, ((seq_len // 2) // 128) * 128)
    elif bsz >= 16:
        b_tile = max(8, ((bsz // 2) // 8) * 8)
    return b_tile, s_tile


def sinusoidal_positional_embedding(ids, embedding_dim, padding_idx=0,
                                    left_pad=0, out_dtype=jnp.float32,
                                    b_tile=None, s_tile=None):
    """ids: int32 [bsz, seq_len] -> out_dtype [bsz, seq_len, embedding_dim]."""
    ids = ids.astype(jnp.int32)
    bsz, seq_len = ids.shape
    half_dim = embedding_dim // 2
    assert half_dim >= 1, "embedding_dim must be >= 2"

    out_itemsize = jnp.dtype(out_dtype).itemsize
    vmem_cap = _vmem_capacity_bytes()
    # ~8 MiB output tiles on 128 MiB parts (v5e/v6e), ~4 MiB on 64 MiB (v7x).
    target_bytes = max(2 << 20, vmem_cap // 16)

    auto_b, auto_s = _choose_tiles(bsz, seq_len, embedding_dim,
                                   out_itemsize, target_bytes)
    auto_b, auto_s = _ensure_two_grid_steps(bsz, seq_len, auto_b, auto_s)
    b_tile = auto_b if b_tile is None else b_tile
    s_tile = auto_s if s_tile is None else s_tile

    # NOTE: deliberate divergence from fairseq for embedding_dim in {2, 3}:
    # fairseq divides by zero there; we clamp the denominator to 1.
    denom = max(half_dim - 1, 1)
    inv_freq = jnp.exp(
        jnp.arange(half_dim, dtype=jnp.float32) * (-math.log(10000.0) / denom)
    ).reshape(1, half_dim)

    if left_pad:
        # Count-based left_pad shift: matches fairseq for genuinely left-padded
        # rows; with interspersed padding the semantics stay count-based.
        nonpad = jnp.sum((ids != padding_idx).astype(jnp.int32), axis=1,
                         keepdims=True)
        delta = nonpad - seq_len                              # (bsz, 1) int32
    else:
        delta = jnp.zeros((bsz, 1), jnp.int32)                # unused in kernel

    grid = (pl.cdiv(bsz, b_tile), pl.cdiv(seq_len, s_tile))

    kernel = functools.partial(
        _sin_pos_emb_kernel,
        padding_idx=padding_idx,
        left_pad=bool(left_pad),
    )

    # VMEM budget: double-buffered out + ids tiles, plus f32 temporaries
    # (sin/cos/mask work), capped well below physical VMEM (75%).
    out_tile_bytes = b_tile * s_tile * embedding_dim * out_itemsize
    ids_tile_bytes = b_tile * s_tile * 4
    work_bytes = 3 * b_tile * s_tile * half_dim * 4
    need = 2 * (out_tile_bytes + ids_tile_bytes) + work_bytes + (1 << 20)
    vmem_limit = int(min(int(0.75 * vmem_cap), max(32 << 20, need)))
    # TODO(synk): for embedding_dim >> 2048, tile the D axis as well instead of
    # relying on a larger vmem_limit_bytes.

    flops_per_elem = 7 if left_pad else 2
    cost = pl.CostEstimate(
        flops=flops_per_elem * bsz * seq_len * half_dim,
        transcendentals=2 * grid[0] * seq_len * half_dim
                        + (2 * grid[1] * bsz * half_dim if left_pad else 0),
        bytes_accessed=bsz * seq_len * embedding_dim * out_itemsize
                       + bsz * seq_len * 4,
    )

    out = pl.pallas_call(
        kernel,
        out_shape=jax.ShapeDtypeStruct((bsz, seq_len, embedding_dim), out_dtype),
        grid=grid,
        in_specs=[
            pl.BlockSpec((b_tile, s_tile), lambda b, s: (b, s)),   # ids
            pl.BlockSpec((1, half_dim), lambda b, s: (0, 0)),      # inv_freq
            pl.BlockSpec((b_tile, 1), lambda b, s: (b, 0)),        # delta
        ],
        out_specs=pl.BlockSpec((b_tile, s_tile, embedding_dim),
                               lambda b, s: (b, s, 0)),
        compiler_params=pltpu.CompilerParams(
            dimension_semantics=("parallel", "parallel"),
            vmem_limit_bytes=vmem_limit),
        cost_estimate=cost,
    )(ids, inv_freq, delta)
    return out


def _reference(ids, embedding_dim, padding_idx=0, left_pad=0):
    """Pure-JAX reference mirroring the PyTorch module (table + gather)."""
    bsz, seq_len = ids.shape
    max_pos = padding_idx + 1 + seq_len
    half_dim = embedding_dim // 2
    emb_scale = math.log(10000.0) / (half_dim - 1)
    inv_freq = jnp.exp(jnp.arange(half_dim, dtype=jnp.float32) * -emb_scale)
    ang = jnp.arange(max_pos, dtype=jnp.float32)[:, None] * inv_freq[None, :]
    table = jnp.concatenate([jnp.sin(ang), jnp.cos(ang)], axis=1)
    if embedding_dim % 2 == 1:
        table = jnp.concatenate([table, jnp.zeros((max_pos, 1))], axis=1)
    table = table.at[padding_idx, :].set(0.0)

    mask = ids != padding_idx
    pos = jnp.arange(padding_idx + 1, padding_idx + 1 + seq_len,
                     dtype=jnp.int32)[None, :]
    pos = jnp.broadcast_to(pos, (bsz, seq_len))
    if left_pad:
        pos = pos - seq_len + jnp.sum(mask, axis=1, keepdims=True)
    positions = jnp.where(mask, pos, padding_idx)
    return table[positions.reshape(-1)].reshape(bsz, seq_len, embedding_dim)


if __name__ == "__main__":
    key = jax.random.PRNGKey(0)

    # --- test 1: small shape, right padding (left_pad=0), even dim ---
    bsz, seq_len, embedding_dim, padding_idx = 2, 8, 32, 0
    ids = jax.random.randint(key, (bsz, seq_len), 0, 10, dtype=jnp.int32)
    ids = ids.at[1, -3:].set(padding_idx)                # explicit right pad

    out = sinusoidal_positional_embedding(ids, embedding_dim,
                                          padding_idx=padding_idx, left_pad=0)
    out = jax.block_until_ready(out)
    ref = _reference(ids, embedding_dim, padding_idx=padding_idx, left_pad=0)
    assert out.shape == (bsz, seq_len, embedding_dim)
    assert jnp.allclose(out, ref, atol=1e-5, rtol=1e-5)

    # --- test 2: multi-tile grid (partial blocks), left padding, odd dim ---
    bsz2, seq_len2, dim2, pad_idx2 = 10, 160, 65, 1
    key2 = jax.random.PRNGKey(0)
    ids2 = jax.random.randint(key2, (bsz2, seq_len2), pad_idx2 + 1,
                              pad_idx2 + 10, dtype=jnp.int32)
    for r in range(bsz2):                                # genuine left padding
        ids2 = ids2.at[r, :r].set(pad_idx2)

    out2 = sinusoidal_positional_embedding(ids2, dim2, padding_idx=pad_idx2,
                                           left_pad=1, b_tile=8, s_tile=128)
    out2 = jax.block_until_ready(out2)
    ref2 = _reference(ids2, dim2, padding_idx=pad_idx2, left_pad=1)
    assert out2.shape == (bsz2, seq_len2, dim2)
    # slightly looser tolerance: left_pad path uses the sin/cos angle-addition
    # identity (f32), which differs from the reference's direct sin(a+d) by a
    # few ulps of the range-reduced angle.
    assert jnp.allclose(out2, ref2, atol=2e-4, rtol=1e-5)

    print("KERNEL_OK")
</pallas_src>

<mosaic_0001>
module attributes {stable_mosaic.version = 11 : i64} {
  func.func @_sin_pos_emb_kernel(%arg0: i32, %arg1: i32, %arg2: memref<2x8xi32, #tpu.memory_space<vmem>>, %arg3: memref<1x16xf32, #tpu.memory_space<vmem>>, %arg4: memref<2x1xi32, #tpu.memory_space<vmem>>, %arg5: memref<2x8x32xf32, #tpu.memory_space<vmem>>) attributes {dimension_semantics = [#tpu.dimension_semantics<parallel>, #tpu.dimension_semantics<parallel>], iteration_bounds = array<i64: 1, 1>, scalar_prefetch = 0 : i64, scratch_operands = 0 : i64, tpu.core_type = #tpu.core_type<tc>, window_params = [{transform_indices = @transform_0, window_bounds = array<i64: 2, 8>}, {pipeline_mode = #tpu.pipeline_mode<synchronous>, transform_indices = @transform_1, window_bounds = array<i64: 1, 16>}, {transform_indices = @transform_2, window_bounds = array<i64: 2, 1>}, {transform_indices = @transform_3, window_bounds = array<i64: 2, 8, 32>}]} {
    %c0 = arith.constant 0 : index
    %c0_0 = arith.constant 0 : index
    %0 = vector.load %arg2[%c0, %c0_0] : memref<2x8xi32, #tpu.memory_space<vmem>>, vector<2x8xi32>
    %c0_i32 = arith.constant 0 : i32
    %1 = vector.broadcast %c0_i32 : i32 to vector<2x8xi32>
    %2 = arith.cmpi ne, %0, %1 : vector<2x8xi32>
    %3 = arith.extui %2 : vector<2x8xi1> to vector<2x8xi32>
    %4 = arith.sitofp %3 : vector<2x8xi32> to vector<2x8xf32>
    %5 = vector.shape_cast %4 : vector<2x8xf32> to vector<2x8x1xf32>
    %c8_i32 = arith.constant 8 : i32
    %6 = arith.muli %arg1, %c8_i32 : i32
    %7 = tpu.iota {dimensions = array<i32: 0>} : vector<8x1xi32>
    %c0_i32_1 = arith.constant 0 : i32
    %8 = arith.addi %6, %c0_i32_1 : i32
    %c1_i32 = arith.constant 1 : i32
    %9 = arith.addi %8, %c1_i32 : i32
    %10 = vector.broadcast %9 : i32 to vector<8x1xi32>
    %11 = arith.addi %7, %10 : vector<8x1xi32>
    %12 = arith.sitofp %11 : vector<8x1xi32> to vector<8x1xf32>
    %c0_2 = arith.constant 0 : index
    %c0_3 = arith.constant 0 : index
    %13 = vector.load %arg3[%c0_2, %c0_3] : memref<1x16xf32, #tpu.memory_space<vmem>>, vector<1x16xf32>
    %14 = vector.broadcast %12 : vector<8x1xf32> to vector<8x16xf32>
    %15 = vector.broadcast %13 : vector<1x16xf32> to vector<8x16xf32>
    %16 = arith.mulf %14, %15 : vector<8x16xf32>
    %17 = math.sin %16 : vector<8x16xf32>
    %18 = vector.shape_cast %17 : vector<8x16xf32> to vector<1x8x16xf32>
    %19 = math.cos %16 : vector<8x16xf32>
    %20 = vector.shape_cast %19 : vector<8x16xf32> to vector<1x8x16xf32>
    %21 = vector.broadcast %18 : vector<1x8x16xf32> to vector<2x8x16xf32>
    %22 = vector.broadcast %5 : vector<2x8x1xf32> to vector<2x8x16xf32>
    %23 = arith.mulf %21, %22 : vector<2x8x16xf32>
    %c0_4 = arith.constant 0 : index
    %c0_5 = arith.constant 0 : index
    %c0_6 = arith.constant 0 : index
    %24 = vector.load %arg5[%c0_4, %c0_5, %c0_6] : memref<2x8x32xf32, #tpu.memory_space<vmem>>, vector<2x8x16xf32>
    tpu.vector_store %arg5[%c0_4, %c0_5, %c0_6], %23 {strides = array<i32>} : memref<2x8x32xf32, #tpu.memory_space<vmem>>, vector<2x8x16xf32>,
    %25 = vector.broadcast %20 : vector<1x8x16xf32> to vector<2x8x16xf32>
    %26 = vector.broadcast %5 : vector<2x8x1xf32> to vector<2x8x16xf32>
    %27 = arith.mulf %25, %26 : vector<2x8x16xf32>
    %c0_7 = arith.constant 0 : index
    %c0_8 = arith.constant 0 : index
    %c16 = arith.constant 16 : index
    %28 = vector.load %arg5[%c0_7, %c0_8, %c16] : memref<2x8x32xf32, #tpu.memory_space<vmem>>, vector<2x8x16xf32>
    tpu.vector_store %arg5[%c0_7, %c0_8, %c16], %27 {strides = array<i32>} : memref<2x8x32xf32, #tpu.memory_space<vmem>>, vector<2x8x16xf32>,
    return
  }
  func.func @transform_0(%arg0: i32, %arg1: i32) -> (i32, i32) {
    %c0_i32 = arith.constant 0 : i32
    return %arg0, %arg1 : i32, i32
  }
  func.func @transform_1(%arg0: i32, %arg1: i32) -> (i32, i32) {
    %c0_i32 = arith.constant 0 : i32
    %c0_i32_0 = arith.constant 0 : i32
    %c0_i32_1 = arith.constant 0 : i32
    return %c0_i32, %c0_i32_0 : i32, i32
  }
  func.func @transform_2(%arg0: i32, %arg1: i32) -> (i32, i32) {
    %c0_i32 = arith.constant 0 : i32
    %c0_i32_0 = arith.constant 0 : i32
    return %arg0, %c0_i32 : i32, i32
  }
  func.func @transform_3(%arg0: i32, %arg1: i32) -> (i32, i32, i32) {
    %c0_i32 = arith.constant 0 : i32
    %c0_i32_0 = arith.constant 0 : i32
    return %arg0, %arg1, %c0_i32 : i32, i32, i32
  }
}

</mosaic_0001>

<llo_original>
// kernel: tpu_custom_call.1
$region0: #{tpu_custom_call.1}
  #allocation0 [shape = 'u32[]', space=smem, size = 0x4, offset = 0x4, fixed_abs, tag = 'smem constant byte address 0x4 - core index']
  #allocation1 [shape = 'u32[144,128]{1,0:T(1,128)}', space=vmem, size = 0x12000, scoped, tag = 'internal scratch']
  %s0 = inlined_call_operand.vmem [shape: s32[2,8], index: 0, kind: input, shape index: {}]
  %s1 = inlined_call_operand.vmem [shape: f32[1,16], index: 1, kind: input, shape index: {}]
  %s2 = inlined_call_operand.vmem [shape: s32[2,1], index: 2, kind: input, shape index: {}]
  %s3 = inlined_call_operand.hbm [shape: f32[2,8,32], index: 3, kind: output, shape index: {}]
  %s4 = sld [smem:[#allocation0]]
  $region22: #{tpu_custom_call.1} parent=0
    _
  %s6 = ssub.s32 1, %s4
  %s7 = scalar_select 0, %s6, %s4
  $region1: #{tpu_custom_call.1} parent=0
    #allocation2 [shape = 'u8[8192]{0}', space=vmem, size = 0x2000, scoped, tag = 'output window, operand 0, single buffered']
    #allocation3 [shape = 's32[1]{0}', space=sflag, size = 0x4, scoped, tag = 'scoped memory for tpu_custom_call.1']
    %8 = vsyncpa [#allocation3], 0
    // Predicated region
    $region2: #{tpu_custom_call.1} parent=1 // pred_check
      _
    $region3: #{tpu_custom_call.1} parent=1 // pred_check_branch
      %10 = sbr.rel (0) target = $region5
    $region4: #{tpu_custom_call.1} parent=1 // pred_region
      _
    $region5: #{tpu_custom_call.1} parent=1 // pred_fallthru
      _
    // Predicated region
    $region6: #{tpu_custom_call.1} parent=1 // pred_check
      _
    $region7: #{tpu_custom_call.1} parent=1 // pred_check_branch
      %12 = sbr.rel (0) target = $region9
    $region8: #{tpu_custom_call.1} parent=1 // pred_region
      _
    $region9: #{tpu_custom_call.1} parent=1 // pred_fallthru
      _
    // Predicated region
    $region10: #{tpu_custom_call.1} parent=1 // pred_check
      _
    $region11: #{tpu_custom_call.1} parent=1 // pred_check_branch
      %14 = sbr.rel (0) target = $region13
    $region12: #{tpu_custom_call.1} parent=1 // pred_region
      _
    $region13: #{tpu_custom_call.1} parent=1 // pred_fallthru
      _
    %v15 = vld [vmem:[%s0] sm:$0x3]
    %vm16 = vcmp.ne.s32.totalorder %v15, 0
    %v17 = vsel %vm16, 1, 0
    %v18 = vcvt.s32.f32 %v17
    %v19 = vlaneseq
    %v20 = vshrl.u32 %v19, 7
    %v21 = vsub.s32 0, %v20
    %v22 = vrot.slane %v18, %v21
    %24 = vbcast.lane.b32.xlu0 %v22, 256
    %v25 = vpop.permute.xlu0 %24
    %v26 = vlaneseq
    %v27 = vshrl.u32 %v26, 7
    %v28 = vsub.s32 1, %v27
    %v29 = vrot.slane %v18, %v28
    %31 = vbcast.lane.b32.xlu0 %v29, 256
    %v32 = vpop.permute.xlu0 %31
    %s33 = smul.u32 0, 8
    %v34 = vlaneseq
    %v35 = vshrl.u32 %v34, 7
    %s36 = sadd.s32 %s33, 1
    %v37 = vstv %s36
    %v38 = vadd.s32 %v35, %v37
    %v39 = vcvt.s32.f32 %v38
    %v40 = vld [vmem:[%s1] sm:$0x1]
    %v42 = vlaneseq
    %v43 = vshrl.u32 %v42, 7
    %v44 = vsub.s32 0, %v43
    %v45 = vrot.slane %v40, %v44
    %v47 = vmul.f32 %v39, %v45
    %v48 = vand.u32 2147483647, %v47
    %vm49 = vcmp.le.f32.partialorder %v48, 0.7853982
    %vm50 = vcmp.lt.s32.totalorder %v47, 0
    %v51 = vand.u32 %v47, 2139095040
    %v52 = vshrl.u32 %v51, 23
    %v53 = vsub.s32 %v52, 127
    %v54 = vand.u32 2147483647, %v47
    %v55 = vand.u32 %v54, 8388607
    %v56 = vor.u32 %v55, 8388608
    %v57 = vsub.s32 0, %v56
    %v58 = vadd.s32 %v53, 1
    %vm59 = vcmp.gt.s32.totalorder %v58, 0
    %v60 = vsel %vm59, %v58, 0
    %v61 = vshrl.u32 %v60, 5
    %v62 = vand.u32 %v60, 31
    %v63 = vsub.s32 32, %v62
    %v64 = vshrl.u32 683565275, %v63
    %v65 = vshll.u32 683565275, %v62
    %v66 = vshrl.u32 2475754826, %v63
    %v67 = vor.u32 %v65, %v66
    %v68 = vshll.u32 2475754826, %v62
    %v69 = vshrl.u32 2131351028, %v63
    %v70 = vor.u32 %v68, %v69
    %v71 = vshll.u32 2131351028, %v62
    %v72 = vshrl.u32 2102212464, %v63
    %v73 = vor.u32 %v71, %v72
    %v74 = vshll.u32 2102212464, %v62
    %v75 = vshrl.u32 920167782, %v63
    %v76 = vor.u32 %v74, %v75
    %v77 = vshll.u32 920167782, %v62
    %v78 = vshrl.u32 1326507024, %v63
    %v79 = vor.u32 %v77, %v78
    %vm80 = vcmp.lt.s32.totalorder %v61, 1
    %vm81 = vcmp.lt.s32.totalorder %v61, 2
    %vm82 = vcmp.lt.s32.totalorder %v61, 3
    %vm83 = vcmp.lt.s32.totalorder %v61, 4
    %v84 = vsel %vm80, %v64, %v67
    %v85 = vsel %vm83, %v73, 2102212464
    %v86 = vsel %vm82, %v70, %v85
    %v87 = vsel %vm81, %v84, %v86
    %v88 = vsel %vm80, %v67, %v70
    %v89 = vsel %vm83, %v76, 920167782
    %v90 = vsel %vm82, %v73, %v89
    %v91 = vsel %vm81, %v88, %v90
    %v92 = vsel %vm80, %v70, %v73
    %v93 = vsel %vm83, %v79, 1326507024
    %v94 = vsel %vm82, %v76, %v93
    %v95 = vsel %vm81, %v92, %v94
    %v96 = vshll.u32 %v56, 8
    %v97 = vmul.u32.u64.compose %v96, %v95
    %v98 = vextract.low.u32 %v97
    %v99 = vextract.high.u32 %v97
    %v100 = vmul.u32.u64.compose %v96, %v91
    %v101 = vextract.low.u32 %v100
    %v102 = vextract.high.u32 %v100
    %v103 = vmul.u32 %v96, %v87
    %v104 = vadd.s32 %v99, %v101
    %vm105 = vc.u32 %v99, %v101
    %v106 = vadd.s32 %v102, 1
    %v107 = vsel %vm105, %v106, %v102
    %v108 = vadd.s32 %v103, %v107
    %v109 = vadd.s32 %v108, 536870912
    %v110 = vshrl.u32 %v109, 30
    %v111 = vshll.u32 %v110, 30
    %v112 = vsub.s32 %v108, %v111
    %vm113 = vcmp.lt.s32.totalorder %v112, 0
    %v114 = vsub.s32 0, %v112
    %v115 = vsel %vm113, %v114, %v112
    %v116 = vclz %v115
    %v117 = vsub.s32 %v116, 2
    %vm118 = vcmp.gt.s32.totalorder 0, %v117
    %v119 = vsel %vm118, 0, %v117
    %v120 = vsub.s32 32, %v119
    %v121 = vshll.u32 %v112, %v119
    %v122 = vshrl.u32 %v104, %v120
    %v123 = vor.u32 %v121, %v122
    %v124 = vsub.s32 4294967266, %v119
    %v125 = vadd.s32 %v124, 127
    %v126 = vshll.u32 %v125, 23
    %v127 = vor.u32 4788187, %v126
    %v128 = vand.u32 2147483647, %v127
    %v130 = vcvt.s32.f32 %v123
    %v131 = vmul.f32 %v130, %v128
    %v132 = vxor.u32 %v131, 2147483648
    %v133 = vsel %vm50, %v132, %v131
    %v134 = vsub.s32 4, %v110
    %v135 = vsel %vm50, %v134, %v110
    %v136 = vsel %vm49, %v47, %v133
    %v137 = vsel %vm49, 0, %v135
    %v138 = vcosq.f32.pop %v136
    %v139 = vsinq.f32.pop %v136
    %vm140 = vweird.f32 %v47
    %v141 = vadd.s32 %v137, 3
    %v142 = vand.u32 %v141, 3
    %vm143 = vcmp.lt.s32.totalorder %v142, 2
    %vm144 = vcmp.eq.s32.totalorder %v142, 0
    %v145 = vxor.u32 %v139, 2147483648
    %v146 = vsel %vm144, %v138, %v145
    %vm147 = vcmp.eq.s32.totalorder %v142, 2
    %v148 = vxor.u32 %v138, 2147483648
    %v149 = vsel %vm147, %v148, %v139
    %v150 = vsel %vm143, %v146, %v149
    %v151 = vsel %vm140, nan, %v150
    %v152 = vand.u32 2147483647, %v47
    %vm153 = vcmp.le.f32.partialorder %v152, 0.7853982
    %vm154 = vcmp.lt.s32.totalorder %v47, 0
    %v155 = vand.u32 %v47, 2139095040
    %v156 = vshrl.u32 %v155, 23
    %v157 = vsub.s32 %v156, 127
    %v158 = vand.u32 2147483647, %v47
    %v159 = vand.u32 %v158, 8388607
    %v160 = vor.u32 %v159, 8388608
    %v161 = vsub.s32 0, %v160
    %v162 = vadd.s32 %v157, 1
    %vm163 = vcmp.gt.s32.totalorder %v162, 0
    %v164 = vsel %vm163, %v162, 0
    %v165 = vshrl.u32 %v164, 5
    %v166 = vand.u32 %v164, 31
    %v167 = vsub.s32 32, %v166
    %v168 = vshrl.u32 683565275, %v167
    %v169 = vshll.u32 683565275, %v166
    %v170 = vshrl.u32 2475754826, %v167
    %v171 = vor.u32 %v169, %v170
    %v172 = vshll.u32 2475754826, %v166
    %v173 = vshrl.u32 2131351028, %v167
    %v174 = vor.u32 %v172, %v173
    %v175 = vshll.u32 2131351028, %v166
    %v176 = vshrl.u32 2102212464, %v167
    %v177 = vor.u32 %v175, %v176
    %v178 = vshll.u32 2102212464, %v166
    %v179 = vshrl.u32 920167782, %v167
    %v180 = vor.u32 %v178, %v179
    %v181 = vshll.u32 920167782, %v166
    %v182 = vshrl.u32 1326507024, %v167
    %v183 = vor.u32 %v181, %v182
    %vm184 = vcmp.lt.s32.totalorder %v165, 1
    %vm185 = vcmp.lt.s32.totalorder %v165, 2
    %vm186 = vcmp.lt.s32.totalorder %v165, 3
    %vm187 = vcmp.lt.s32.totalorder %v165, 4
    %v188 = vsel %vm184, %v168, %v171
    %v189 = vsel %vm187, %v177, 2102212464
    %v190 = vsel %vm186, %v174, %v189
    %v191 = vsel %vm185, %v188, %v190
    %v192 = vsel %vm184, %v171, %v174
    %v193 = vsel %vm187, %v180, 920167782
    %v194 = vsel %vm186, %v177, %v193
    %v195 = vsel %vm185, %v192, %v194
    %v196 = vsel %vm184, %v174, %v177
    %v197 = vsel %vm187, %v183, 1326507024
    %v198 = vsel %vm186, %v180, %v197
    %v199 = vsel %vm185, %v196, %v198
    %v200 = vshll.u32 %v160, 8
    %v201 = vmul.u32.u64.compose %v200, %v199
    %v202 = vextract.low.u32 %v201
    %v203 = vextract.high.u32 %v201
    %v204 = vmul.u32.u64.compose %v200, %v195
    %v205 = vextract.low.u32 %v204
    %v206 = vextract.high.u32 %v204
    %v207 = vmul.u32 %v200, %v191
    %v208 = vadd.s32 %v203, %v205
    %vm209 = vc.u32 %v203, %v205
    %v210 = vadd.s32 %v206, 1
    %v211 = vsel %vm209, %v210, %v206
    %v212 = vadd.s32 %v207, %v211
    %v213 = vadd.s32 %v212, 536870912
    %v214 = vshrl.u32 %v213, 30
    %v215 = vshll.u32 %v214, 30
    %v216 = vsub.s32 %v212, %v215
    %vm217 = vcmp.lt.s32.totalorder %v216, 0
    %v218 = vsub.s32 0, %v216
    %v219 = vsel %vm217, %v218, %v216
    %v220 = vclz %v219
    %v221 = vsub.s32 %v220, 2
    %vm222 = vcmp.gt.s32.totalorder 0, %v221
    %v223 = vsel %vm222, 0, %v221
    %v224 = vsub.s32 32, %v223
    %v225 = vshll.u32 %v216, %v223
    %v226 = vshrl.u32 %v208, %v224
    %v227 = vor.u32 %v225, %v226
    %v228 = vsub.s32 4294967266, %v223
    %v229 = vadd.s32 %v228, 127
    %v230 = vshll.u32 %v229, 23
    %v231 = vor.u32 4788187, %v230
    %v232 = vand.u32 2147483647, %v231
    %v234 = vcvt.s32.f32 %v227
    %v235 = vmul.f32 %v234, %v232
    %v236 = vxor.u32 %v235, 2147483648
    %v237 = vsel %vm154, %v236, %v235
    %v238 = vsub.s32 4, %v214
    %v239 = vsel %vm154, %v238, %v214
    %v240 = vsel %vm153, %v47, %v237
    %v241 = vsel %vm153, 0, %v239
    %v242 = vcosq.f32.pop %v240
    %v243 = vsinq.f32.pop %v240
    %vm244 = vweird.f32 %v47
    %v245 = vand.u32 %v241, 3
    %vm246 = vcmp.lt.s32.totalorder %v245, 2
    %vm247 = vcmp.eq.s32.totalorder %v245, 0
    %v248 = vxor.u32 %v243, 2147483648
    %v249 = vsel %vm247, %v242, %v248
    %vm250 = vcmp.eq.s32.totalorder %v245, 2
    %v251 = vxor.u32 %v242, 2147483648
    %v252 = vsel %vm250, %v251, %v243
    %v253 = vsel %vm246, %v249, %v252
    %v254 = vsel %vm244, nan, %v253
    %v255 = vmul.f32 %v151, %v25
    %v256 = vmul.f32 %v151, %v32
    %vm257 = vcmask 130048
    %258 = vst.msk [vmem:[#allocation2] sm:$0xff] %vm257, %v255
    %259 = vst.msk [vmem:[#allocation2 + $0x8] sm:$0xff] %vm257, %v256
    %v260 = vmul.f32 %v254, %v25
    %v261 = vmul.f32 %v254, %v32
    %264 = vrot.lane.b32.xlu0 %v260, 16
    %v265 = vpop.permute.xlu0 %264
    %266 = vrot.lane.b32.xlu0 %v261, 16
    %v267 = vpop.permute.xlu0 %266
    %vm270 = vcmask 261248
    %271 = vst.msk [vmem:[#allocation2] sm:$0xff] %vm270, %v265
    %272 = vst.msk [vmem:[#allocation2 + $0x8] sm:$0xff] %vm270, %v267
    // Predicated region
    $region14: #{tpu_custom_call.1} parent=1 // pred_check
      _
    $region15: #{tpu_custom_call.1} parent=1 // pred_check_branch
      %274 = sbr.rel (0) target = $region17
    $region16: #{tpu_custom_call.1} parent=1 // pred_region
      %s276 = ssub.s32 256, 256
      %277 = vsyncadd [#allocation3], %s276
      %s278 = sshll.u32 [#allocation2], 4
      %s279 = int_to_ptr.vmem [resolvable:$true] %s278
      %284 = dma.vmem_to_hbm [thread:$0]  %s279, 256, %s3, [#allocation3], 128, 128, 8
    $region17: #{tpu_custom_call.1} parent=1 // pred_fallthru
      _
    // Predicated region
    $region18: #{tpu_custom_call.1} parent=1 // pred_check
      _
    $region19: #{tpu_custom_call.1} parent=1 // pred_check_branch
      %286 = sbr.rel (0) target = $region21
    $region20: #{tpu_custom_call.1} parent=1 // pred_region
      %287 = dma.done [#allocation3], 256
    $region21: #{tpu_custom_call.1} parent=1 // pred_fallthru
      _
    %288 = vsyncpa [#allocation3], 1

</llo_original>
